<compile_context>
chip_gen: v7x
topology: tpu7x:2x2x1
jax: 0.10.0
libtpu: 0.0.40
codegen_flags: <defaults>
</compile_context>

<pallas_src>
import jax
import jax.numpy as jnp
from jax.experimental import pallas as pl
from jax.experimental.pallas import tpu as pltpu

_LANE = 128
_SUBLANE = 8


def _round_up(n, m):
    return ((n + m - 1) // m) * m


def _pad2d(a, rows, cols):
    pr, pc = rows - a.shape[0], cols - a.shape[1]
    if pr or pc:
        a = jnp.pad(a, ((0, pr), (0, pc)))
    return a


def _mlp_actor_kernel(ma_ref, x_ref, w1_ref, b1_ref, w2_ref, b2_ref,
                      w3_ref, b3_ref, o_ref):
    """One batch tile: [TB, S] -> [TB, A_p]; hidden/output dims 128-aligned."""
    x = x_ref[...]
    # Layer 1: Linear + ReLU (MXU matmul, f32 accumulation; contraction dim S
    # is unpadded -- Mosaic pads it internally at no extra vmatmul cost).
    h1 = jnp.dot(x.astype(w1_ref.dtype), w1_ref[...],
                 preferred_element_type=jnp.float32) + b1_ref[...]
    h1 = jnp.maximum(h1, 0.0)
    # Layer 2: Linear + Tanh.
    h2 = jnp.dot(h1.astype(w2_ref.dtype), w2_ref[...],
                 preferred_element_type=jnp.float32) + b2_ref[...]
    h2 = jnp.tanh(h2)
    # Layer 3: Linear + Tanh, scaled by the runtime max_action SMEM scalar.
    a = jnp.dot(h2.astype(w3_ref.dtype), w3_ref[...],
                preferred_element_type=jnp.float32) + b3_ref[...]
    a = jnp.tanh(a)
    o_ref[...] = (a * ma_ref[0, 0]).astype(o_ref.dtype)


def prepare_mlp_actor_params(params, *, use_bf16_matmul=True):
    """Pad (zero) hidden/output dims to 128 lanes and cast weights once.

    Zero padding is mathematically exact for this Linear/ReLU/Tanh chain:
    padded weight rows/cols and biases are zero, and ReLU(0)=tanh(0)=0.
    """
    w1, b1 = params["w1"], params["b1"]
    w2, b2 = params["w2"], params["b2"]
    w3, b3 = params["w3"], params["b3"]
    S, H = w1.shape
    H2, A = w2.shape[1], w3.shape[1]
    H_p, H2_p, A_p = (_round_up(d, _LANE) for d in (H, H2, A))
    w_dtype = jnp.bfloat16 if use_bf16_matmul else w1.dtype
    return {
        "prepared": True,
        "dims": (S, H, H2, A),
        "pdims": (S, H_p, H2_p, A_p),
        "w1": _pad2d(w1, S, H_p).astype(w_dtype),
        "b1": _pad2d(jnp.reshape(b1, (1, -1)), 1, H_p).astype(jnp.float32),
        "w2": _pad2d(w2, H_p, H2_p).astype(w_dtype),
        "b2": _pad2d(jnp.reshape(b2, (1, -1)), 1, H2_p).astype(jnp.float32),
        "w3": _pad2d(w3, H2_p, A_p).astype(w_dtype),
        "b3": _pad2d(jnp.reshape(b3, (1, -1)), 1, A_p).astype(jnp.float32),
    }


def mlp_actor_forward(state, params, max_action, *, tile_b=None,
                      use_bf16_matmul=True):
    """state: [B, state_dim] float32 -> action: [B, action_dim] float32."""
    if not (isinstance(params, dict) and params.get("prepared", False)):
        params = prepare_mlp_actor_params(params, use_bf16_matmul=use_bf16_matmul)

    S, H, H2, A = params["dims"]
    _, H_p, H2_p, A_p = params["pdims"]
    B, S_in = state.shape
    assert S_in == S, f"state feature dim {S_in} != weight fan-in {S}"

    # --- generation-aware tile / VMEM selection -----------------------------
    try:
        vmem_cap = int(pltpu.get_tpu_info().vmem_capacity_bytes)
    except Exception:
        vmem_cap = 64 << 20                       # conservative (v7x per-TC)
    small_vmem = vmem_cap <= (64 << 20)           # v7x-like (2 TCs, 64 MiB)

    if tile_b is None:
        cap = 512 if small_vmem else 2048
        if small_vmem:
            # v7x: ensure >=2 "parallel" grid steps so the batch axis can
            # shard across both TensorCores.
            tile_b = pl.cdiv(B, 2)
        else:
            tile_b = B
        tile_b = max(1, min(cap, tile_b))

    TB = min(int(tile_b), B)
    if TB < B:
        TB = _round_up(TB, _SUBLANE)
        if TB >= B:
            TB = B                                # full-extent block, no partials
    grid = (pl.cdiv(B, TB),)

    # Explicit VMEM budget from the real footprint (double-buffered IO tiles,
    # weights/biases, f32 activations) + headroom, capped to 3/4 of capacity.
    w_elt = jnp.dtype(params["w1"].dtype).itemsize
    x_elt = jnp.dtype(state.dtype).itemsize
    resident = w_elt * (S * H_p + H_p * H2_p + H2_p * A_p) + 4 * (H_p + H2_p + A_p)
    tile_io = x_elt * TB * S + 4 * TB * A_p
    acts = 4 * TB * (H_p + H2_p + A_p)
    need = 2 * resident + 2 * tile_io + acts + (8 << 20)
    vmem_limit = int(min(max(need, 16 << 20), (vmem_cap * 3) // 4))

    ma = jnp.asarray(max_action, jnp.float32).reshape(1, 1)
    const = lambda i: (0, 0)   # weights/biases: constant block index -> VMEM-resident
    out_p = pl.pallas_call(
        _mlp_actor_kernel,
        out_shape=jax.ShapeDtypeStruct((B, A_p), state.dtype),
        grid=grid,
        in_specs=[
            pl.BlockSpec(memory_space=pltpu.MemorySpace.SMEM),   # max_action
            pl.BlockSpec((TB, S), lambda i: (i, 0)),             # state tile (unpadded S)
            pl.BlockSpec((S, H_p), const),                       # w1
            pl.BlockSpec((1, H_p), const),                       # b1
            pl.BlockSpec((H_p, H2_p), const),                    # w2
            pl.BlockSpec((1, H2_p), const),                      # b2
            pl.BlockSpec((H2_p, A_p), const),                    # w3
            pl.BlockSpec((1, A_p), const),                       # b3
        ],
        out_specs=pl.BlockSpec((TB, A_p), lambda i: (i, 0)),
        compiler_params=pltpu.CompilerParams(
            dimension_semantics=("parallel",),
            vmem_limit_bytes=vmem_limit),
    )(ma, state, params["w1"], params["b1"], params["w2"], params["b2"],
      params["w3"], params["b3"])

    return out_p[:, :A]


def init_mlp_actor_params(key, state_dim, action_dim, hidden_dim=400):
    """PyTorch-default-style Linear init: uniform(+-1/sqrt(fan_in)).
    Weights stored (in, out); biases kept 2-D as (1, out)."""
    h2 = hidden_dim // 2
    ks = jax.random.split(key, 6)

    def lin(kw, kb, fan_in, fan_out):
        bound = 1.0 / jnp.sqrt(jnp.float32(fan_in))
        w = jax.random.uniform(kw, (fan_in, fan_out), jnp.float32, -bound, bound)
        b = jax.random.uniform(kb, (1, fan_out), jnp.float32, -bound, bound)
        return w, b

    w1, b1 = lin(ks[0], ks[1], state_dim, hidden_dim)
    w2, b2 = lin(ks[2], ks[3], hidden_dim, h2)
    w3, b3 = lin(ks[4], ks[5], h2, action_dim)
    return {"w1": w1, "b1": b1, "w2": w2, "b2": b2, "w3": w3, "b3": b3}


def _reference_forward(state, params, max_action):
    h1 = jnp.maximum(state @ params["w1"] + params["b1"], 0.0)
    h2 = jnp.tanh(h1 @ params["w2"] + params["b2"])
    a = jnp.tanh(h2 @ params["w3"] + params["b3"])
    return a * max_action


if __name__ == "__main__":
    # Small, forward-consistent shapes.
    batch = 2
    state_dim = 16
    action_dim = 8
    hidden_dim = 32          # hidden//2 = 16
    max_action = 2.0

    key = jax.random.PRNGKey(0)
    k_params, k_state, k_state2, k_state3 = jax.random.split(key, 4)

    params = init_mlp_actor_params(k_params, state_dim, action_dim, hidden_dim)
    state = jax.random.normal(k_state, (batch, state_dim), jnp.float32)
    ref = _reference_forward(state, params, max_action)

    # Prepare (pad + cast) params once, outside the forward path.
    params_f32 = prepare_mlp_actor_params(params, use_bf16_matmul=False)
    params_bf16 = prepare_mlp_actor_params(params)          # bf16 matmul default

    # f32 path: exact vs reference.
    out = jax.block_until_ready(mlp_actor_forward(state, params_f32, max_action))
    assert out.shape == (batch, action_dim)
    assert jnp.allclose(out, ref, atol=1e-5, rtol=1e-5), "mismatch vs reference (f32)"

    # bf16-matmul default path (f32 accumulation): expected small precision loss.
    out_bf = jax.block_until_ready(mlp_actor_forward(state, params_bf16, max_action))
    assert out_bf.shape == (batch, action_dim)
    assert jnp.allclose(out_bf, ref, atol=3e-2, rtol=3e-2), "mismatch vs reference (bf16)"

    # Multi-tile pipelined path (grid > 1), evenly divided.
    state2 = jax.random.normal(k_state2, (24, state_dim), jnp.float32)
    out2 = jax.block_until_ready(
        mlp_actor_forward(state2, params_f32, max_action, tile_b=8))
    ref2 = _reference_forward(state2, params, max_action)
    assert out2.shape == (24, action_dim)
    assert jnp.allclose(out2, ref2, atol=1e-5, rtol=1e-5), "mismatch (tiled)"

    # Partial last block (B not a multiple of the tile): OOB rows are dropped.
    state3 = jax.random.normal(k_state3, (13, state_dim), jnp.float32)
    out3 = jax.block_until_ready(
        mlp_actor_forward(state3, params_f32, max_action, tile_b=8))
    ref3 = _reference_forward(state3, params, max_action)
    assert out3.shape == (13, action_dim)
    assert jnp.allclose(out3, ref3, atol=1e-5, rtol=1e-5), "mismatch (partial block)"

    print("KERNEL_OK")
</pallas_src>

<mosaic_0001>
module attributes {stable_mosaic.version = 11 : i64} {
  func.func @_mlp_actor_kernel(%arg0: i32, %arg1: memref<1x1xf32, #tpu.memory_space<smem>>, %arg2: memref<2x16xf32, #tpu.memory_space<vmem>>, %arg3: memref<16x128xf32, #tpu.memory_space<vmem>>, %arg4: memref<1x128xf32, #tpu.memory_space<vmem>>, %arg5: memref<128x128xf32, #tpu.memory_space<vmem>>, %arg6: memref<1x128xf32, #tpu.memory_space<vmem>>, %arg7: memref<128x128xf32, #tpu.memory_space<vmem>>, %arg8: memref<1x128xf32, #tpu.memory_space<vmem>>, %arg9: memref<2x128xf32, #tpu.memory_space<vmem>>) attributes {dimension_semantics = [#tpu.dimension_semantics<parallel>], iteration_bounds = array<i64: 1>, scalar_prefetch = 0 : i64, scratch_operands = 0 : i64, tpu.core_type = #tpu.core_type<tc>, window_params = [{transform_indices = @transform_0, window_bounds = array<i64: 1, 1>}, {transform_indices = @transform_1, window_bounds = array<i64: 2, 16>}, {pipeline_mode = #tpu.pipeline_mode<synchronous>, transform_indices = @transform_2, window_bounds = array<i64: 16, 128>}, {pipeline_mode = #tpu.pipeline_mode<synchronous>, transform_indices = @transform_3, window_bounds = array<i64: 1, 128>}, {pipeline_mode = #tpu.pipeline_mode<synchronous>, transform_indices = @transform_4, window_bounds = array<i64: 128, 128>}, {pipeline_mode = #tpu.pipeline_mode<synchronous>, transform_indices = @transform_5, window_bounds = array<i64: 1, 128>}, {pipeline_mode = #tpu.pipeline_mode<synchronous>, transform_indices = @transform_6, window_bounds = array<i64: 128, 128>}, {pipeline_mode = #tpu.pipeline_mode<synchronous>, transform_indices = @transform_7, window_bounds = array<i64: 1, 128>}, {transform_indices = @transform_8, window_bounds = array<i64: 2, 128>}]} {
    %c0 = arith.constant 0 : index
    %c0_0 = arith.constant 0 : index
    %0 = vector.load %arg2[%c0, %c0_0] : memref<2x16xf32, #tpu.memory_space<vmem>>, vector<2x16xf32>
    %c0_1 = arith.constant 0 : index
    %c0_2 = arith.constant 0 : index
    %1 = vector.load %arg3[%c0_1, %c0_2] : memref<16x128xf32, #tpu.memory_space<vmem>>, vector<16x128xf32>
    %cst = arith.constant dense<0.000000e+00> : vector<2x128xf32>
    %2 = tpu.matmul %0, %1, %cst {dimension_numbers = #tpu.dot_dimension_numbers<[1], [0], [0], [1], [0, 0, 1, 1], [], []>} : vector<2x16xf32>, vector<16x128xf32>, vector<2x128xf32> -> vector<2x128xf32>
    %c0_3 = arith.constant 0 : index
    %c0_4 = arith.constant 0 : index
    %3 = vector.load %arg4[%c0_3, %c0_4] : memref<1x128xf32, #tpu.memory_space<vmem>>, vector<1x128xf32>
    %4 = vector.broadcast %3 : vector<1x128xf32> to vector<2x128xf32>
    %5 = arith.addf %2, %4 : vector<2x128xf32>
    %cst_5 = arith.constant 0.000000e+00 : f32
    %6 = vector.broadcast %cst_5 : f32 to vector<2x128xf32>
    %7 = arith.maximumf %5, %6 : vector<2x128xf32>
    %c0_6 = arith.constant 0 : index
    %c0_7 = arith.constant 0 : index
    %8 = vector.load %arg5[%c0_6, %c0_7] : memref<128x128xf32, #tpu.memory_space<vmem>>, vector<128x128xf32>
    %cst_8 = arith.constant dense<0.000000e+00> : vector<2x128xf32>
    %9 = tpu.matmul %7, %8, %cst_8 {dimension_numbers = #tpu.dot_dimension_numbers<[1], [0], [0], [1], [0, 0, 1, 1], [], []>} : vector<2x128xf32>, vector<128x128xf32>, vector<2x128xf32> -> vector<2x128xf32>
    %c0_9 = arith.constant 0 : index
    %c0_10 = arith.constant 0 : index
    %10 = vector.load %arg6[%c0_9, %c0_10] : memref<1x128xf32, #tpu.memory_space<vmem>>, vector<1x128xf32>
    %11 = vector.broadcast %10 : vector<1x128xf32> to vector<2x128xf32>
    %12 = arith.addf %9, %11 : vector<2x128xf32>
    %13 = math.tanh %12 : vector<2x128xf32>
    %c0_11 = arith.constant 0 : index
    %c0_12 = arith.constant 0 : index
    %14 = vector.load %arg7[%c0_11, %c0_12] : memref<128x128xf32, #tpu.memory_space<vmem>>, vector<128x128xf32>
    %cst_13 = arith.constant dense<0.000000e+00> : vector<2x128xf32>
    %15 = tpu.matmul %13, %14, %cst_13 {dimension_numbers = #tpu.dot_dimension_numbers<[1], [0], [0], [1], [0, 0, 1, 1], [], []>} : vector<2x128xf32>, vector<128x128xf32>, vector<2x128xf32> -> vector<2x128xf32>
    %c0_14 = arith.constant 0 : index
    %c0_15 = arith.constant 0 : index
    %16 = vector.load %arg8[%c0_14, %c0_15] : memref<1x128xf32, #tpu.memory_space<vmem>>, vector<1x128xf32>
    %17 = vector.broadcast %16 : vector<1x128xf32> to vector<2x128xf32>
    %18 = arith.addf %15, %17 : vector<2x128xf32>
    %19 = math.tanh %18 : vector<2x128xf32>
    %c0_16 = arith.constant 0 : index
    %c0_17 = arith.constant 0 : index
    %20 = memref.load %arg1[%c0_16, %c0_17] : memref<1x1xf32, #tpu.memory_space<smem>>
    %21 = vector.broadcast %20 : f32 to vector<2x128xf32>
    %22 = arith.mulf %19, %21 : vector<2x128xf32>
    %c0_18 = arith.constant 0 : index
    %c0_19 = arith.constant 0 : index
    %23 = vector.load %arg9[%c0_18, %c0_19] : memref<2x128xf32, #tpu.memory_space<vmem>>, vector<2x128xf32>
    tpu.vector_store %arg9[%c0_18, %c0_19], %22 {strides = array<i32>} : memref<2x128xf32, #tpu.memory_space<vmem>>, vector<2x128xf32>,
    return
  }
  func.func @transform_0(%arg0: i32) -> (i32, i32) {
    %c0_i32 = arith.constant 0 : i32
    %c0_i32_0 = arith.constant 0 : i32
    %c0_i32_1 = arith.constant 0 : i32
    return %c0_i32, %c0_i32_0 : i32, i32
  }
  func.func @transform_1(%arg0: i32) -> (i32, i32) {
    %c0_i32 = arith.constant 0 : i32
    %c0_i32_0 = arith.constant 0 : i32
    return %arg0, %c0_i32 : i32, i32
  }
  func.func @transform_2(%arg0: i32) -> (i32, i32) {
    %c0_i32 = arith.constant 0 : i32
    %c0_i32_0 = arith.constant 0 : i32
    %c0_i32_1 = arith.constant 0 : i32
    return %c0_i32, %c0_i32_0 : i32, i32
  }
  func.func @transform_3(%arg0: i32) -> (i32, i32) {
    %c0_i32 = arith.constant 0 : i32
    %c0_i32_0 = arith.constant 0 : i32
    %c0_i32_1 = arith.constant 0 : i32
    return %c0_i32, %c0_i32_0 : i32, i32
  }
  func.func @transform_4(%arg0: i32) -> (i32, i32) {
    %c0_i32 = arith.constant 0 : i32
    %c0_i32_0 = arith.constant 0 : i32
    %c0_i32_1 = arith.constant 0 : i32
    return %c0_i32, %c0_i32_0 : i32, i32
  }
  func.func @transform_5(%arg0: i32) -> (i32, i32) {
    %c0_i32 = arith.constant 0 : i32
    %c0_i32_0 = arith.constant 0 : i32
    %c0_i32_1 = arith.constant 0 : i32
    return %c0_i32, %c0_i32_0 : i32, i32
  }
  func.func @transform_6(%arg0: i32) -> (i32, i32) {
    %c0_i32 = arith.constant 0 : i32
    %c0_i32_0 = arith.constant 0 : i32
    %c0_i32_1 = arith.constant 0 : i32
    return %c0_i32, %c0_i32_0 : i32, i32
  }
  func.func @transform_7(%arg0: i32) -> (i32, i32) {
    %c0_i32 = arith.constant 0 : i32
    %c0_i32_0 = arith.constant 0 : i32
    %c0_i32_1 = arith.constant 0 : i32
    return %c0_i32, %c0_i32_0 : i32, i32
  }
  func.func @transform_8(%arg0: i32) -> (i32, i32) {
    %c0_i32 = arith.constant 0 : i32
    %c0_i32_0 = arith.constant 0 : i32
    return %arg0, %c0_i32 : i32, i32
  }
}

</mosaic_0001>

<llo_original>
// kernel: tpu_custom_call.1
$region0: #{tpu_custom_call.1}
  #allocation0 [shape = 'u32[]', space=smem, size = 0x4, offset = 0x4, fixed_abs, tag = 'smem constant byte address 0x4 - core index']
  #allocation1 [shape = 'u32[144,128]{1,0:T(1,128)}', space=vmem, size = 0x12000, scoped, tag = 'internal scratch']
  #allocation2 [shape = 'f32[1,1]{1,0:T(1,128)S(6)}', space=smem, size = 0x200, scoped, tag = 'scoped memory for tpu_custom_call.1']
  %s0 = inlined_call_operand.<no memory space> [shape: f32[1,1], index: 0, kind: input, shape index: {}]
  %s1 = inlined_call_operand.vmem [shape: f32[2,16], index: 1, kind: input, shape index: {}]
  %s2 = inlined_call_operand.hbm [shape: f32[16,128], index: 2, kind: input, shape index: {}]
  %s3 = inlined_call_operand.vmem [shape: f32[1,128], index: 3, kind: input, shape index: {}]
  %s4 = inlined_call_operand.hbm [shape: f32[128,128], index: 4, kind: input, shape index: {}]
  %s5 = inlined_call_operand.vmem [shape: f32[1,128], index: 5, kind: input, shape index: {}]
  %s6 = inlined_call_operand.hbm [shape: f32[128,128], index: 6, kind: input, shape index: {}]
  %s7 = inlined_call_operand.vmem [shape: f32[1,128], index: 7, kind: input, shape index: {}]
  %s8 = inlined_call_operand.hbm [shape: f32[2,128], index: 8, kind: output, shape index: {}]
  %s9 = sld [smem:[#allocation0]]
  $region54: #{tpu_custom_call.1} parent=0
    _
  %s11 = ssub.s32 1, %s9
  %s12 = scalar_select 0, %s11, %s9
  %13 = sst [smem:[#allocation2]] %s0
  $region1: #{tpu_custom_call.1} parent=0
    #allocation3 [shape = 'u8[8192]{0}', space=vmem, size = 0x2000, scoped, tag = 'input window, operand 2, single buffered']
    #allocation4 [shape = 's32[1]{0}', space=sflag, size = 0x4, scoped, tag = 'scoped memory for tpu_custom_call.1']
    #allocation5 [shape = 's32[1]{0}', space=sflag, size = 0x4, scoped, tag = 'scoped memory for tpu_custom_call.1']
    #allocation6 [shape = 'u8[65536]{0}', space=vmem, size = 0x10000, scoped, tag = 'input window, operand 4, single buffered']
    #allocation7 [shape = 's32[1]{0}', space=sflag, size = 0x4, scoped, tag = 'scoped memory for tpu_custom_call.1']
    #allocation8 [shape = 'u8[65536]{0}', space=vmem, size = 0x10000, scoped, tag = 'input window, operand 6, single buffered']
    #allocation9 [shape = 'u8[1024]{0}', space=vmem, size = 0x400, scoped, tag = 'output window, operand 0, single buffered']
    %14 = vsyncpa [#allocation4], 0
    %15 = vsyncpa [#allocation7], 0
    %16 = vsyncpa [#allocation5], 0
    // Predicated region
    $region2: #{tpu_custom_call.1} parent=1 // pred_check
      _
    $region3: #{tpu_custom_call.1} parent=1 // pred_check_branch
      %18 = sbr.rel (0) target = $region5
    $region4: #{tpu_custom_call.1} parent=1 // pred_region
      _
    $region5: #{tpu_custom_call.1} parent=1 // pred_fallthru
      _
    // Predicated region
    $region6: #{tpu_custom_call.1} parent=1 // pred_check
      _
    $region7: #{tpu_custom_call.1} parent=1 // pred_check_branch
      %20 = sbr.rel (0) target = $region9
    $region8: #{tpu_custom_call.1} parent=1 // pred_region
      _
    $region9: #{tpu_custom_call.1} parent=1 // pred_fallthru
      _
    // Predicated region
    $region10: #{tpu_custom_call.1} parent=1 // pred_check
      _
    $region11: #{tpu_custom_call.1} parent=1 // pred_check_branch
      %22 = sbr.rel (0) target = $region13
    $region12: #{tpu_custom_call.1} parent=1 // pred_region
      %s24 = ssub.s32 256, 256
      %25 = vsyncadd [#allocation4], %s24
      %s26 = sshll.u32 [#allocation3], 4
      %s27 = int_to_ptr.vmem [resolvable:$true] %s26
      %32 = dma.hbm_to_vmem [thread:$0]  %s2, 256, %s27, [#allocation4], 128, 128, 8
    $region13: #{tpu_custom_call.1} parent=1 // pred_fallthru
      _
    // Predicated region
    $region14: #{tpu_custom_call.1} parent=1 // pred_check
      _
    $region15: #{tpu_custom_call.1} parent=1 // pred_check_branch
      %34 = sbr.rel (0) target = $region17
    $region16: #{tpu_custom_call.1} parent=1 // pred_region
      _
    $region17: #{tpu_custom_call.1} parent=1 // pred_fallthru
      _
    // Predicated region
    $region18: #{tpu_custom_call.1} parent=1 // pred_check
      _
    $region19: #{tpu_custom_call.1} parent=1 // pred_check_branch
      %36 = sbr.rel (0) target = $region21
    $region20: #{tpu_custom_call.1} parent=1 // pred_region
      %s38 = ssub.s32 2048, 2048
      %39 = vsyncadd [#allocation7], %s38
      %s40 = sshll.u32 [#allocation6], 4
      %s41 = int_to_ptr.vmem [resolvable:$true] %s40
      %46 = dma.hbm_to_vmem [thread:$0]  %s4, 2048, %s41, [#allocation7], 128, 128, 8
    $region21: #{tpu_custom_call.1} parent=1 // pred_fallthru
      _
    // Predicated region
    $region22: #{tpu_custom_call.1} parent=1 // pred_check
      _
    $region23: #{tpu_custom_call.1} parent=1 // pred_check_branch
      %48 = sbr.rel (0) target = $region25
    $region24: #{tpu_custom_call.1} parent=1 // pred_region
      _
    $region25: #{tpu_custom_call.1} parent=1 // pred_fallthru
      _
    // Predicated region
    $region26: #{tpu_custom_call.1} parent=1 // pred_check
      _
    $region27: #{tpu_custom_call.1} parent=1 // pred_check_branch
      %50 = sbr.rel (0) target = $region29
    $region28: #{tpu_custom_call.1} parent=1 // pred_region
      %s52 = ssub.s32 2048, 2048
      %53 = vsyncadd [#allocation7], %s52
      %s54 = sshll.u32 [#allocation8], 4
      %s55 = int_to_ptr.vmem [resolvable:$true] %s54
      %60 = dma.hbm_to_vmem [thread:$0]  %s6, 2048, %s55, [#allocation7], 128, 128, 8
    $region29: #{tpu_custom_call.1} parent=1 // pred_fallthru
      _
    // Predicated region
    $region30: #{tpu_custom_call.1} parent=1 // pred_check
      _
    $region31: #{tpu_custom_call.1} parent=1 // pred_check_branch
      %62 = sbr.rel (0) target = $region33
    $region32: #{tpu_custom_call.1} parent=1 // pred_region
      _
    $region33: #{tpu_custom_call.1} parent=1 // pred_fallthru
      _
    // Predicated region
    $region34: #{tpu_custom_call.1} parent=1 // pred_check
      _
    $region35: #{tpu_custom_call.1} parent=1 // pred_check_branch
      %64 = sbr.rel (0) target = $region37
    $region36: #{tpu_custom_call.1} parent=1 // pred_region
      %65 = dma.done [#allocation4], 256
    $region37: #{tpu_custom_call.1} parent=1 // pred_fallthru
      _
    // Predicated region
    $region38: #{tpu_custom_call.1} parent=1 // pred_check
      _
    $region39: #{tpu_custom_call.1} parent=1 // pred_check_branch
      %67 = sbr.rel (0) target = $region41
    $region40: #{tpu_custom_call.1} parent=1 // pred_region
      %68 = dma.done [#allocation7], 2048
    $region41: #{tpu_custom_call.1} parent=1 // pred_fallthru
      _
    // Predicated region
    $region42: #{tpu_custom_call.1} parent=1 // pred_check
      _
    $region43: #{tpu_custom_call.1} parent=1 // pred_check_branch
      %70 = sbr.rel (0) target = $region45
    $region44: #{tpu_custom_call.1} parent=1 // pred_region
      %71 = dma.done [#allocation7], 2048
    $region45: #{tpu_custom_call.1} parent=1 // pred_fallthru
      _
    %v72 = vld [vmem:[%s1] sm:$0x3]
    %v73 = vld [vmem:[#allocation3] sm:$0xff]
    %v74 = vld [vmem:[#allocation3 + $0x8] sm:$0xff]
    %v75 = vld [vmem:[%s3] sm:$0x1]
    %v77 = vlaneseq
    %v78 = vshrl.u32 %v77, 7
    %v79 = vsub.s32 0, %v78
    %v80 = vrot.slane %v75, %v79
    %vm82 = vcmask 130048
    %v84 = vsel %vm82, %v72, 0
    %86 = vmatprep.subr.mxu0 0.0
    %87 = vmatpush1.msra.mxu0 %v73
    %88 = vmatprep.subr.mxu0 0.0
    %89 = vmatpush1.msra.mxu0 %v74
    %90 = vmatprep.subr.mxu0 0.0
    %91 = vmatpush1.msra.mxu0 0.0
    %92 = vmatprep.subr.mxu0 0.0
    %93 = vmatpush1.msra.mxu0 0.0
    %94 = vmatprep.subr.mxu0 0.0
    %95 = vmatpush1.msra.mxu0 0.0
    %96 = vmatprep.subr.mxu0 0.0
    %97 = vmatpush1.msra.mxu0 0.0
    %98 = vmatprep.subr.mxu0 0.0
    %99 = vmatpush1.msra.mxu0 0.0
    %100 = vmatprep.subr.mxu0 0.0
    %101 = vmatpush1.msra.mxu0 0.0
    %102 = vmatprep.subr.mxu0 0.0
    %103 = vmatpush1.msra.mxu0 0.0
    %104 = vmatprep.subr.mxu0 0.0
    %105 = vmatpush1.msra.mxu0 0.0
    %106 = vmatprep.subr.mxu0 0.0
    %107 = vmatpush1.msra.mxu0 0.0
    %108 = vmatprep.subr.mxu0 0.0
    %109 = vmatpush1.msra.mxu0 0.0
    %110 = vmatprep.subr.mxu0 0.0
    %111 = vmatpush1.msra.mxu0 0.0
    %112 = vmatprep.subr.mxu0 0.0
    %113 = vmatpush1.msra.mxu0 0.0
    %114 = vmatprep.subr.mxu0 0.0
    %115 = vmatpush1.msra.mxu0 0.0
    %116 = vmatprep.subr.mxu0 0.0
    %117 = vmatpush1.msra.mxu0 0.0
    %118 = vmatprep.subr.mxu0 0.0
    %119 = vmatpush1.msra.mxu0 0.0
    %120 = vmatprep.subr.mxu0 0.0
    %121 = vmatpush1.msra.mxu0 0.0
    %122 = vmatprep.subr.mxu0 0.0
    %123 = vmatpush1.msra.mxu0 0.0
    %124 = vmatprep.subr.mxu0 0.0
    %125 = vmatpush1.msra.mxu0 0.0
    %126 = vmatprep.subr.mxu0 0.0
    %127 = vmatpush1.msra.mxu0 0.0
    %128 = vmatprep.subr.mxu0 0.0
    %129 = vmatpush1.msra.mxu0 0.0
    %130 = vmatprep.subr.mxu0 0.0
    %131 = vmatpush1.msra.mxu0 0.0
    %132 = vmatprep.subr.mxu0 0.0
    %133 = vmatpush1.msra.mxu0 0.0
    %134 = vmatprep.subr.mxu0 0.0
    %135 = vmatpush1.msra.mxu0 0.0
    %136 = vmatprep.subr.mxu0 0.0
    %137 = vmatpush1.msra.mxu0 0.0
    %138 = vmatprep.subr.mxu0 0.0
    %139 = vmatpush1.msra.mxu0 0.0
    %140 = vmatprep.subr.mxu0 0.0
    %141 = vmatpush1.msra.mxu0 0.0
    %142 = vmatprep.subr.mxu0 0.0
    %143 = vmatpush1.msra.mxu0 0.0
    %144 = vmatprep.subr.mxu0 0.0
    %145 = vmatpush1.msra.mxu0 0.0
    %146 = vmatprep.subr.mxu0 0.0
    %147 = vmatpush1.msra.mxu0 0.0
    %148 = vmatprep.subr.mxu0 0.0
    %149 = vmatpush1.msra.mxu0 0.0
    %150 = vmatprep.mubr.f32.mxu0 0.0
    %151 = vmatmul.mubr.f32.gmra.mrb[0].mxu0 %v84
    %v152 = vpop.f32.mrb[0].mxu0
    %v153 = vadd.f32 %v80, %v152
    %v154 = vpop.f32.mrb[0].mxu0
    %155 = vdwg.mxu0
    %v156 = vmax.f32 %v153, 0.0
    %v157 = vld [vmem:[#allocation6] sm:$0xff]
    %v158 = vld [vmem:[#allocation6 + $0x8] sm:$0xff]
    %v159 = vld [vmem:[#allocation6 + $0x10] sm:$0xff]
    %v160 = vld [vmem:[#allocation6 + $0x18] sm:$0xff]
    %v161 = vld [vmem:[#allocation6 + $0x20] sm:$0xff]
    %v162 = vld [vmem:[#allocation6 + $0x28] sm:$0xff]
    %v163 = vld [vmem:[#allocation6 + $0x30] sm:$0xff]
    %v164 = vld [vmem:[#allocation6 + $0x38] sm:$0xff]
    %v165 = vld [vmem:[#allocation6 + $0x40] sm:$0xff]
    %v166 = vld [vmem:[#allocation6 + $0x48] sm:$0xff]
    %v167 = vld [vmem:[#allocation6 + $0x50] sm:$0xff]
    %v168 = vld [vmem:[#allocation6 + $0x58] sm:$0xff]
    %v169 = vld [vmem:[#allocation6 + $0x60] sm:$0xff]
    %v170 = vld [vmem:[#allocation6 + $0x68] sm:$0xff]
    %v171 = vld [vmem:[#allocation6 + $0x70] sm:$0xff]
    %v172 = vld [vmem:[#allocation6 + $0x78] sm:$0xff]
    %v173 = vld [vmem:[%s5] sm:$0x1]
    %v175 = vlaneseq
    %v176 = vshrl.u32 %v175, 7
    %v177 = vsub.s32 0, %v176
    %v178 = vrot.slane %v173, %v177
    %180 = vmatprep.subr.mxu0 0.0
    %181 = vmatpush1.msra.mxu0 %v157
    %182 = vmatprep.subr.mxu0 0.0
    %183 = vmatpush1.msra.mxu0 %v158
    %184 = vmatprep.subr.mxu0 0.0
    %185 = vmatpush1.msra.mxu0 %v159
    %186 = vmatprep.subr.mxu0 0.0
    %187 = vmatpush1.msra.mxu0 %v160
    %188 = vmatprep.subr.mxu0 0.0
    %189 = vmatpush1.msra.mxu0 %v161
    %190 = vmatprep.subr.mxu0 0.0
    %191 = vmatpush1.msra.mxu0 %v162
    %192 = vmatprep.subr.mxu0 0.0
    %193 = vmatpush1.msra.mxu0 %v163
    %194 = vmatprep.subr.mxu0 0.0
    %195 = vmatpush1.msra.mxu0 %v164
    %196 = vmatprep.subr.mxu0 0.0
    %197 = vmatpush1.msra.mxu0 %v165
    %198 = vmatprep.subr.mxu0 0.0
    %199 = vmatpush1.msra.mxu0 %v166
    %200 = vmatprep.subr.mxu0 0.0
    %201 = vmatpush1.msra.mxu0 %v167
    %202 = vmatprep.subr.mxu0 0.0
    %203 = vmatpush1.msra.mxu0 %v168
    %204 = vmatprep.subr.mxu0 0.0
    %205 = vmatpush1.msra.mxu0 %v169
    %206 = vmatprep.subr.mxu0 0.0
    %207 = vmatpush1.msra.mxu0 %v170
    %208 = vmatprep.subr.mxu0 0.0
    %209 = vmatpush1.msra.mxu0 %v171
    %210 = vmatprep.subr.mxu0 0.0
    %211 = vmatpush1.msra.mxu0 %v172
    %212 = vmatprep.subr.mxu0 0.0
    %213 = vmatpush1.msra.mxu0 0.0
    %214 = vmatprep.subr.mxu0 0.0
    %215 = vmatpush1.msra.mxu0 0.0
    %216 = vmatprep.subr.mxu0 0.0
    %217 = vmatpush1.msra.mxu0 0.0
    %218 = vmatprep.subr.mxu0 0.0
    %219 = vmatpush1.msra.mxu0 0.0
    %220 = vmatprep.subr.mxu0 0.0
    %221 = vmatpush1.msra.mxu0 0.0
    %222 = vmatprep.subr.mxu0 0.0
    %223 = vmatpush1.msra.mxu0 0.0
    %224 = vmatprep.subr.mxu0 0.0
    %225 = vmatpush1.msra.mxu0 0.0
    %226 = vmatprep.subr.mxu0 0.0
    %227 = vmatpush1.msra.mxu0 0.0
    %228 = vmatprep.subr.mxu0 0.0
    %229 = vmatpush1.msra.mxu0 0.0
    %230 = vmatprep.subr.mxu0 0.0
    %231 = vmatpush1.msra.mxu0 0.0
    %232 = vmatprep.subr.mxu0 0.0
    %233 = vmatpush1.msra.mxu0 0.0
    %234 = vmatprep.subr.mxu0 0.0
    %235 = vmatpush1.msra.mxu0 0.0
    %236 = vmatprep.subr.mxu0 0.0
    %237 = vmatpush1.msra.mxu0 0.0
    %238 = vmatprep.subr.mxu0 0.0
    %239 = vmatpush1.msra.mxu0 0.0
    %240 = vmatprep.subr.mxu0 0.0
    %241 = vmatpush1.msra.mxu0 0.0
    %242 = vmatprep.subr.mxu0 0.0
    %243 = vmatpush1.msra.mxu0 0.0
    %244 = vmatprep.mubr.f32.mxu0 0.0
    %245 = vmatmul.mubr.f32.gmra.mrb[0].mxu0 %v156
    %v246 = vpop.f32.mrb[0].mxu0
    %v247 = vadd.f32 %v178, %v246
    %v248 = vpop.f32.mrb[0].mxu0
    %249 = vdwg.mxu0
    %v250 = vtanh.pop %v247
    %v251 = vld [vmem:[#allocation8] sm:$0xff]
    %v252 = vld [vmem:[#allocation8 + $0x8] sm:$0xff]
    %v253 = vld [vmem:[#allocation8 + $0x10] sm:$0xff]
    %v254 = vld [vmem:[#allocation8 + $0x18] sm:$0xff]
    %v255 = vld [vmem:[#allocation8 + $0x20] sm:$0xff]
    %v256 = vld [vmem:[#allocation8 + $0x28] sm:$0xff]
    %v257 = vld [vmem:[#allocation8 + $0x30] sm:$0xff]
    %v258 = vld [vmem:[#allocation8 + $0x38] sm:$0xff]
    %v259 = vld [vmem:[#allocation8 + $0x40] sm:$0xff]
    %v260 = vld [vmem:[#allocation8 + $0x48] sm:$0xff]
    %v261 = vld [vmem:[#allocation8 + $0x50] sm:$0xff]
    %v262 = vld [vmem:[#allocation8 + $0x58] sm:$0xff]
    %v263 = vld [vmem:[#allocation8 + $0x60] sm:$0xff]
    %v264 = vld [vmem:[#allocation8 + $0x68] sm:$0xff]
    %v265 = vld [vmem:[#allocation8 + $0x70] sm:$0xff]
    %v266 = vld [vmem:[#allocation8 + $0x78] sm:$0xff]
    %v267 = vld [vmem:[%s7] sm:$0x1]
    %v269 = vlaneseq
    %v270 = vshrl.u32 %v269, 7
    %v271 = vsub.s32 0, %v270
    %v272 = vrot.slane %v267, %v271
    %274 = vmatprep.subr.mxu0 0.0
    %275 = vmatpush1.msra.mxu0 %v251
    %276 = vmatprep.subr.mxu0 0.0
    %277 = vmatpush1.msra.mxu0 %v252
    %278 = vmatprep.subr.mxu0 0.0
    %279 = vmatpush1.msra.mxu0 %v253
    %280 = vmatprep.subr.mxu0 0.0
    %281 = vmatpush1.msra.mxu0 %v254
    %282 = vmatprep.subr.mxu0 0.0
    %283 = vmatpush1.msra.mxu0 %v255
    %284 = vmatprep.subr.mxu0 0.0
    %285 = vmatpush1.msra.mxu0 %v256
    %286 = vmatprep.subr.mxu0 0.0
    %287 = vmatpush1.msra.mxu0 %v257
    %288 = vmatprep.subr.mxu0 0.0
    %289 = vmatpush1.msra.mxu0 %v258
    %290 = vmatprep.subr.mxu0 0.0
    %291 = vmatpush1.msra.mxu0 %v259
    %292 = vmatprep.subr.mxu0 0.0
    %293 = vmatpush1.msra.mxu0 %v260
    %294 = vmatprep.subr.mxu0 0.0
    %295 = vmatpush1.msra.mxu0 %v261
    %296 = vmatprep.subr.mxu0 0.0
    %297 = vmatpush1.msra.mxu0 %v262
    %298 = vmatprep.subr.mxu0 0.0
    %299 = vmatpush1.msra.mxu0 %v263
    %300 = vmatprep.subr.mxu0 0.0
    %301 = vmatpush1.msra.mxu0 %v264
    %302 = vmatprep.subr.mxu0 0.0
    %303 = vmatpush1.msra.mxu0 %v265
    %304 = vmatprep.subr.mxu0 0.0
    %305 = vmatpush1.msra.mxu0 %v266
    %306 = vmatprep.subr.mxu0 0.0
    %307 = vmatpush1.msra.mxu0 0.0
    %308 = vmatprep.subr.mxu0 0.0
    %309 = vmatpush1.msra.mxu0 0.0
    %310 = vmatprep.subr.mxu0 0.0
    %311 = vmatpush1.msra.mxu0 0.0
    %312 = vmatprep.subr.mxu0 0.0
    %313 = vmatpush1.msra.mxu0 0.0
    %314 = vmatprep.subr.mxu0 0.0
    %315 = vmatpush1.msra.mxu0 0.0
    %316 = vmatprep.subr.mxu0 0.0
    %317 = vmatpush1.msra.mxu0 0.0
    %318 = vmatprep.subr.mxu0 0.0
    %319 = vmatpush1.msra.mxu0 0.0
    %320 = vmatprep.subr.mxu0 0.0
    %321 = vmatpush1.msra.mxu0 0.0
    %322 = vmatprep.subr.mxu0 0.0
    %323 = vmatpush1.msra.mxu0 0.0
    %324 = vmatprep.subr.mxu0 0.0
    %325 = vmatpush1.msra.mxu0 0.0
    %326 = vmatprep.subr.mxu0 0.0
    %327 = vmatpush1.msra.mxu0 0.0
    %328 = vmatprep.subr.mxu0 0.0
    %329 = vmatpush1.msra.mxu0 0.0
    %330 = vmatprep.subr.mxu0 0.0
    %331 = vmatpush1.msra.mxu0 0.0
    %332 = vmatprep.subr.mxu0 0.0
    %333 = vmatpush1.msra.mxu0 0.0
    %334 = vmatprep.subr.mxu0 0.0
    %335 = vmatpush1.msra.mxu0 0.0
    %336 = vmatprep.subr.mxu0 0.0
    %337 = vmatpush1.msra.mxu0 0.0
    %338 = vmatprep.mubr.f32.mxu0 0.0
    %339 = vmatmul.mubr.f32.gmra.mrb[0].mxu0 %v250
    %v340 = vpop.f32.mrb[0].mxu0
    %v341 = vadd.f32 %v272, %v340
    %v342 = vpop.f32.mrb[0].mxu0
    %343 = vdwg.mxu0
    %v344 = vtanh.pop %v341
    %s345 = sld [smem:[#allocation2]]
    %v346 = vstv %s345
    %v347 = vmul.f32 %v344, %v346
    %348 = vst [vmem:[#allocation9] sm:$0x3] %v347
    // Predicated region
    $region46: #{tpu_custom_call.1} parent=1 // pred_check
      _
    $region47: #{tpu_custom_call.1} parent=1 // pred_check_branch
      %350 = sbr.rel (0) target = $region49
    $region48: #{tpu_custom_call.1} parent=1 // pred_region
      %s352 = ssub.s32 32, 32
      %353 = vsyncadd [#allocation5], %s352
      %s355 = sshll.u32 [#allocation9], 4
      %s356 = int_to_ptr.vmem [resolvable:$true] %s355
      %358 = dma.vmem_to_hbm [thread:$0]  %s356, 32, %s8, [#allocation5]
    $region49: #{tpu_custom_call.1} parent=1 // pred_fallthru
      _
    // Predicated region
    $region50: #{tpu_custom_call.1} parent=1 // pred_check
      _
    $region51: #{tpu_custom_call.1} parent=1 // pred_check_branch
      %360 = sbr.rel (0) target = $region53
    $region52: #{tpu_custom_call.1} parent=1 // pred_region
      %361 = dma.done [#allocation5], 32
    $region53: #{tpu_custom_call.1} parent=1 // pred_fallthru
      _
    %362 = vsyncpa [#allocation4], 1
    %363 = vsyncpa [#allocation7], 1
    %364 = vsyncpa [#allocation5], 1

</llo_original>
